<compile_context>
chip_gen: v6e
topology: v6e:2x2x1
jax: 0.10.0
libtpu: 0.0.40
codegen_flags: <defaults>
</compile_context>

<pallas_src>
import jax
import jax.numpy as jnp
from jax.experimental import pallas as pl
from jax.experimental.pallas import tpu as pltpu


def mlp_kernel(x_ref, w0_ref, b0_ref, w1_ref, b1_ref, w2_ref, b2_ref, o_ref):
    # Layer 0: Linear + ReLU  (Dropout == identity in eval mode)
    h0 = jnp.dot(x_ref[...], w0_ref[...], preferred_element_type=jnp.float32)
    h0 = jnp.maximum(h0 + b0_ref[...], 0.0)
    # Layer 1: Linear + ReLU  (Dropout == identity in eval mode)
    h1 = jnp.dot(h0.astype(w1_ref.dtype), w1_ref[...],
                 preferred_element_type=jnp.float32)
    h1 = jnp.maximum(h1 + b1_ref[...], 0.0)
    # Output layer: Linear (lane-dense padded width; sliced outside the kernel)
    out = jnp.dot(h1.astype(w2_ref.dtype), w2_ref[...],
                  preferred_element_type=jnp.float32)
    o_ref[...] = (out + b2_ref[...]).astype(o_ref.dtype)


def mlp_forward(x, params, *, tb=256, compute_dtype=jnp.float32):
    (w0, b0), (w1, b1), (w2, b2) = params
    B, in_dim = x.shape
    out_dim = w2.shape[1]

    # Lane-dense output: pad the final layer to a multiple of 128 columns so
    # the output store is full-width (no masked vst); slice back afterwards.
    out_pad = pl.cdiv(out_dim, 128) * 128
    if out_pad != out_dim:
        w2 = jnp.pad(w2, ((0, 0), (0, out_pad - out_dim)))
        b2 = jnp.pad(b2, ((0, 0), (0, out_pad - out_dim)))

    # Batch tile: multiple of 8 (f32 sublanes), capped at `tb` to keep the
    # (TB,128) f32 intermediate within the register file.  Pad B to a TB
    # multiple so the last grid step never reads/writes out of bounds.
    TB = min(tb, pl.cdiv(B, 8) * 8)
    Bp = pl.cdiv(B, TB) * TB
    if Bp != B:
        x = jnp.pad(x, ((0, Bp - B), (0, 0)))

    # Optional bf16 MXU operands for large-batch v6e/v7x (one-time cast in the
    # wrapper; accumulation stays f32 via preferred_element_type).
    if compute_dtype != jnp.float32:
        x = x.astype(compute_dtype)
        w0, w1, w2 = (w.astype(compute_dtype) for w in (w0, w1, w2))

    h0_dim = w0.shape[1]
    h1_dim = w1.shape[1]

    def resident(i):      # weights/biases: same block every grid step
        return (0, 0)

    out = pl.pallas_call(
        mlp_kernel,
        out_shape=jax.ShapeDtypeStruct((Bp, out_pad), jnp.float32),
        grid=(Bp // TB,),
        in_specs=[
            pl.BlockSpec((TB, in_dim), lambda i: (i, 0)),
            pl.BlockSpec((in_dim, h0_dim), resident),
            pl.BlockSpec((1, h0_dim), resident),
            pl.BlockSpec((h0_dim, h1_dim), resident),
            pl.BlockSpec((1, h1_dim), resident),
            pl.BlockSpec((h1_dim, out_pad), resident),
            pl.BlockSpec((1, out_pad), resident),
        ],
        out_specs=pl.BlockSpec((TB, out_pad), lambda i: (i, 0)),
        compiler_params=pltpu.CompilerParams(
            dimension_semantics=("parallel",),   # v7x: shard batch tiles across both TCs
        ),
    )(x, w0, b0, w1, b1, w2, b2)

    return out[:B, :out_dim]


def init_linear(key, in_dim, out_dim):
    # Deterministic init mimicking PyTorch nn.Linear: U(-1/sqrt(in), 1/sqrt(in)).
    kw, kb = jax.random.split(key)
    bound = 1.0 / jnp.sqrt(jnp.float32(in_dim))
    # Stored as (in, out) so the kernel does x @ W.
    w = jax.random.uniform(kw, (in_dim, out_dim), jnp.float32, -bound, bound)
    b = jax.random.uniform(kb, (1, out_dim), jnp.float32, -bound, bound)
    return w, b


if __name__ == "__main__":
    key = jax.random.PRNGKey(0)
    k_x, k0, k1, k2 = jax.random.split(key, 4)

    batch = 20                 # deliberately not a multiple of 8: exercises tail padding
    input_dim = 32
    hidden_dims = [128, 64]    # module defaults
    output_dim = 16

    x = jax.random.normal(k_x, (batch, input_dim), jnp.float32)

    params = [
        init_linear(k0, input_dim, hidden_dims[0]),
        init_linear(k1, hidden_dims[0], hidden_dims[1]),
        init_linear(k2, hidden_dims[1], output_dim),
    ]

    y = mlp_forward(x, params)
    y = jax.block_until_ready(y)

    # Pure-JAX reference check of the fused kernel (eval-mode dropout == identity).
    (w0, b0), (w1, b1), (w2, b2) = params
    ref = jnp.maximum(x @ w0 + b0, 0.0)
    ref = jnp.maximum(ref @ w1 + b1, 0.0)
    ref = ref @ w2 + b2
    assert y.shape == (batch, output_dim)
    assert jnp.allclose(y, ref, atol=1e-5, rtol=1e-5)

    print("KERNEL_OK")
</pallas_src>

<mosaic_0001>
module attributes {stable_mosaic.version = 11 : i64} {
  func.func @mlp_kernel(%arg0: i32, %arg1: memref<24x32xf32, #tpu.memory_space<vmem>>, %arg2: memref<32x128xf32, #tpu.memory_space<vmem>>, %arg3: memref<1x128xf32, #tpu.memory_space<vmem>>, %arg4: memref<128x64xf32, #tpu.memory_space<vmem>>, %arg5: memref<1x64xf32, #tpu.memory_space<vmem>>, %arg6: memref<64x128xf32, #tpu.memory_space<vmem>>, %arg7: memref<1x128xf32, #tpu.memory_space<vmem>>, %arg8: memref<24x128xf32, #tpu.memory_space<vmem>>) attributes {dimension_semantics = [#tpu.dimension_semantics<parallel>], iteration_bounds = array<i64: 1>, scalar_prefetch = 0 : i64, scratch_operands = 0 : i64, tpu.core_type = #tpu.core_type<tc>, window_params = [{transform_indices = @transform_0, window_bounds = array<i64: 24, 32>}, {pipeline_mode = #tpu.pipeline_mode<synchronous>, transform_indices = @transform_1, window_bounds = array<i64: 32, 128>}, {pipeline_mode = #tpu.pipeline_mode<synchronous>, transform_indices = @transform_2, window_bounds = array<i64: 1, 128>}, {pipeline_mode = #tpu.pipeline_mode<synchronous>, transform_indices = @transform_3, window_bounds = array<i64: 128, 64>}, {pipeline_mode = #tpu.pipeline_mode<synchronous>, transform_indices = @transform_4, window_bounds = array<i64: 1, 64>}, {pipeline_mode = #tpu.pipeline_mode<synchronous>, transform_indices = @transform_5, window_bounds = array<i64: 64, 128>}, {pipeline_mode = #tpu.pipeline_mode<synchronous>, transform_indices = @transform_6, window_bounds = array<i64: 1, 128>}, {transform_indices = @transform_7, window_bounds = array<i64: 24, 128>}]} {
    %c0 = arith.constant 0 : index
    %c0_0 = arith.constant 0 : index
    %0 = vector.load %arg1[%c0, %c0_0] : memref<24x32xf32, #tpu.memory_space<vmem>>, vector<24x32xf32>
    %c0_1 = arith.constant 0 : index
    %c0_2 = arith.constant 0 : index
    %1 = vector.load %arg2[%c0_1, %c0_2] : memref<32x128xf32, #tpu.memory_space<vmem>>, vector<32x128xf32>
    %cst = arith.constant dense<0.000000e+00> : vector<24x128xf32>
    %2 = tpu.matmul %0, %1, %cst {dimension_numbers = #tpu.dot_dimension_numbers<[1], [0], [0], [1], [0, 0, 1, 1], [], []>} : vector<24x32xf32>, vector<32x128xf32>, vector<24x128xf32> -> vector<24x128xf32>
    %c0_3 = arith.constant 0 : index
    %c0_4 = arith.constant 0 : index
    %3 = vector.load %arg3[%c0_3, %c0_4] : memref<1x128xf32, #tpu.memory_space<vmem>>, vector<1x128xf32>
    %4 = vector.broadcast %3 : vector<1x128xf32> to vector<24x128xf32>
    %5 = arith.addf %2, %4 : vector<24x128xf32>
    %cst_5 = arith.constant 0.000000e+00 : f32
    %6 = vector.broadcast %cst_5 : f32 to vector<24x128xf32>
    %7 = arith.maximumf %5, %6 : vector<24x128xf32>
    %c0_6 = arith.constant 0 : index
    %c0_7 = arith.constant 0 : index
    %8 = vector.load %arg4[%c0_6, %c0_7] : memref<128x64xf32, #tpu.memory_space<vmem>>, vector<128x64xf32>
    %cst_8 = arith.constant dense<0.000000e+00> : vector<24x64xf32>
    %9 = tpu.matmul %7, %8, %cst_8 {dimension_numbers = #tpu.dot_dimension_numbers<[1], [0], [0], [1], [0, 0, 1, 1], [], []>} : vector<24x128xf32>, vector<128x64xf32>, vector<24x64xf32> -> vector<24x64xf32>
    %c0_9 = arith.constant 0 : index
    %c0_10 = arith.constant 0 : index
    %10 = vector.load %arg5[%c0_9, %c0_10] : memref<1x64xf32, #tpu.memory_space<vmem>>, vector<1x64xf32>
    %11 = vector.broadcast %10 : vector<1x64xf32> to vector<24x64xf32>
    %12 = arith.addf %9, %11 : vector<24x64xf32>
    %cst_11 = arith.constant 0.000000e+00 : f32
    %13 = vector.broadcast %cst_11 : f32 to vector<24x64xf32>
    %14 = arith.maximumf %12, %13 : vector<24x64xf32>
    %c0_12 = arith.constant 0 : index
    %c0_13 = arith.constant 0 : index
    %15 = vector.load %arg6[%c0_12, %c0_13] : memref<64x128xf32, #tpu.memory_space<vmem>>, vector<64x128xf32>
    %cst_14 = arith.constant dense<0.000000e+00> : vector<24x128xf32>
    %16 = tpu.matmul %14, %15, %cst_14 {dimension_numbers = #tpu.dot_dimension_numbers<[1], [0], [0], [1], [0, 0, 1, 1], [], []>} : vector<24x64xf32>, vector<64x128xf32>, vector<24x128xf32> -> vector<24x128xf32>
    %c0_15 = arith.constant 0 : index
    %c0_16 = arith.constant 0 : index
    %17 = vector.load %arg7[%c0_15, %c0_16] : memref<1x128xf32, #tpu.memory_space<vmem>>, vector<1x128xf32>
    %18 = vector.broadcast %17 : vector<1x128xf32> to vector<24x128xf32>
    %19 = arith.addf %16, %18 : vector<24x128xf32>
    %c0_17 = arith.constant 0 : index
    %c0_18 = arith.constant 0 : index
    %20 = vector.load %arg8[%c0_17, %c0_18] : memref<24x128xf32, #tpu.memory_space<vmem>>, vector<24x128xf32>
    tpu.vector_store %arg8[%c0_17, %c0_18], %19 {strides = array<i32>} : memref<24x128xf32, #tpu.memory_space<vmem>>, vector<24x128xf32>,
    return
  }
  func.func @transform_0(%arg0: i32) -> (i32, i32) {
    %c0_i32 = arith.constant 0 : i32
    %c0_i32_0 = arith.constant 0 : i32
    return %arg0, %c0_i32 : i32, i32
  }
  func.func @transform_1(%arg0: i32) -> (i32, i32) {
    %c0_i32 = arith.constant 0 : i32
    %c0_i32_0 = arith.constant 0 : i32
    %c0_i32_1 = arith.constant 0 : i32
    return %c0_i32, %c0_i32_0 : i32, i32
  }
  func.func @transform_2(%arg0: i32) -> (i32, i32) {
    %c0_i32 = arith.constant 0 : i32
    %c0_i32_0 = arith.constant 0 : i32
    %c0_i32_1 = arith.constant 0 : i32
    return %c0_i32, %c0_i32_0 : i32, i32
  }
  func.func @transform_3(%arg0: i32) -> (i32, i32) {
    %c0_i32 = arith.constant 0 : i32
    %c0_i32_0 = arith.constant 0 : i32
    %c0_i32_1 = arith.constant 0 : i32
    return %c0_i32, %c0_i32_0 : i32, i32
  }
  func.func @transform_4(%arg0: i32) -> (i32, i32) {
    %c0_i32 = arith.constant 0 : i32
    %c0_i32_0 = arith.constant 0 : i32
    %c0_i32_1 = arith.constant 0 : i32
    return %c0_i32, %c0_i32_0 : i32, i32
  }
  func.func @transform_5(%arg0: i32) -> (i32, i32) {
    %c0_i32 = arith.constant 0 : i32
    %c0_i32_0 = arith.constant 0 : i32
    %c0_i32_1 = arith.constant 0 : i32
    return %c0_i32, %c0_i32_0 : i32, i32
  }
  func.func @transform_6(%arg0: i32) -> (i32, i32) {
    %c0_i32 = arith.constant 0 : i32
    %c0_i32_0 = arith.constant 0 : i32
    %c0_i32_1 = arith.constant 0 : i32
    return %c0_i32, %c0_i32_0 : i32, i32
  }
  func.func @transform_7(%arg0: i32) -> (i32, i32) {
    %c0_i32 = arith.constant 0 : i32
    %c0_i32_0 = arith.constant 0 : i32
    return %arg0, %c0_i32 : i32, i32
  }
}

</mosaic_0001>

<llo_original>
// kernel: tpu_custom_call.1
$region0: #{tpu_custom_call.1}
  #allocation0 [shape = 'u32[]', space=smem, size = 0x4, offset = 0x4, fixed_abs, tag = 'smem constant byte address 0x4 - core index']
  #allocation1 [shape = 'u32[144,128]{1,0:T(1,128)}', space=vmem, size = 0x12000, scoped, tag = 'internal scratch']
  %s0 = inlined_call_operand.vmem [shape: f32[24,32], index: 0, kind: input, shape index: {}]
  %s1 = inlined_call_operand.vmem [shape: f32[32,128], index: 1, kind: input, shape index: {}]
  %s2 = inlined_call_operand.vmem [shape: f32[1,128], index: 2, kind: input, shape index: {}]
  %s3 = inlined_call_operand.vmem [shape: f32[128,64], index: 3, kind: input, shape index: {}]
  %s4 = inlined_call_operand.vmem [shape: f32[1,64], index: 4, kind: input, shape index: {}]
  %s5 = inlined_call_operand.vmem [shape: f32[64,128], index: 5, kind: input, shape index: {}]
  %s6 = inlined_call_operand.vmem [shape: f32[1,128], index: 6, kind: input, shape index: {}]
  %s7 = inlined_call_operand.hbm [shape: f32[24,128], index: 7, kind: output, shape index: {}]
  %s8 = sld [smem:[#allocation0]]
  $region38: #{tpu_custom_call.1} parent=0
    _
  %s10 = ssub.s32 1, %s8
  %s11 = scalar_select 0, %s10, %s8
  $region1: #{tpu_custom_call.1} parent=0
    #allocation2 [shape = 'u8[12288]{0}', space=vmem, size = 0x3000, scoped, tag = 'output window, operand 0, single buffered']
    #allocation3 [shape = 's32[1]{0}', space=sflag, size = 0x4, scoped, tag = 'scoped memory for tpu_custom_call.1']
    %12 = vsyncpa [#allocation3], 0
    // Predicated region
    $region2: #{tpu_custom_call.1} parent=1 // pred_check
      _
    $region3: #{tpu_custom_call.1} parent=1 // pred_check_branch
      %14 = sbr.rel (0) target = $region5
    $region4: #{tpu_custom_call.1} parent=1 // pred_region
      _
    $region5: #{tpu_custom_call.1} parent=1 // pred_fallthru
      _
    // Predicated region
    $region6: #{tpu_custom_call.1} parent=1 // pred_check
      _
    $region7: #{tpu_custom_call.1} parent=1 // pred_check_branch
      %16 = sbr.rel (0) target = $region9
    $region8: #{tpu_custom_call.1} parent=1 // pred_region
      _
    $region9: #{tpu_custom_call.1} parent=1 // pred_fallthru
      _
    // Predicated region
    $region10: #{tpu_custom_call.1} parent=1 // pred_check
      _
    $region11: #{tpu_custom_call.1} parent=1 // pred_check_branch
      %18 = sbr.rel (0) target = $region13
    $region12: #{tpu_custom_call.1} parent=1 // pred_region
      _
    $region13: #{tpu_custom_call.1} parent=1 // pred_fallthru
      _
    // Predicated region
    $region14: #{tpu_custom_call.1} parent=1 // pred_check
      _
    $region15: #{tpu_custom_call.1} parent=1 // pred_check_branch
      %20 = sbr.rel (0) target = $region17
    $region16: #{tpu_custom_call.1} parent=1 // pred_region
      _
    $region17: #{tpu_custom_call.1} parent=1 // pred_fallthru
      _
    // Predicated region
    $region18: #{tpu_custom_call.1} parent=1 // pred_check
      _
    $region19: #{tpu_custom_call.1} parent=1 // pred_check_branch
      %22 = sbr.rel (0) target = $region21
    $region20: #{tpu_custom_call.1} parent=1 // pred_region
      _
    $region21: #{tpu_custom_call.1} parent=1 // pred_fallthru
      _
    // Predicated region
    $region22: #{tpu_custom_call.1} parent=1 // pred_check
      _
    $region23: #{tpu_custom_call.1} parent=1 // pred_check_branch
      %24 = sbr.rel (0) target = $region25
    $region24: #{tpu_custom_call.1} parent=1 // pred_region
      _
    $region25: #{tpu_custom_call.1} parent=1 // pred_fallthru
      _
    // Predicated region
    $region26: #{tpu_custom_call.1} parent=1 // pred_check
      _
    $region27: #{tpu_custom_call.1} parent=1 // pred_check_branch
      %26 = sbr.rel (0) target = $region29
    $region28: #{tpu_custom_call.1} parent=1 // pred_region
      _
    $region29: #{tpu_custom_call.1} parent=1 // pred_fallthru
      _
    %v27 = vld [vmem:[%s0] sm:$0xff]
    %v28 = vld [vmem:[%s0 + $0x8] sm:$0xff]
    %v29 = vld [vmem:[%s0 + $0x10] sm:$0xff]
    %v30 = vld [vmem:[%s1] sm:$0xff]
    %v31 = vld [vmem:[%s1 + $0x8] sm:$0xff]
    %v32 = vld [vmem:[%s1 + $0x10] sm:$0xff]
    %v33 = vld [vmem:[%s1 + $0x18] sm:$0xff]
    %v34 = vld [vmem:[%s2] sm:$0x1]
    %v36 = vlaneseq
    %v37 = vshrl.u32 %v36, 7
    %v38 = vsub.s32 0, %v37
    %v39 = vrot.slane %v34, %v38
    %vm41 = vcmask 261120
    %v43 = vsel %vm41, %v27, 0
    %v46 = vsel %vm41, %v28, 0
    %v49 = vsel %vm41, %v29, 0
    %51 = vmatprep.subr.mxu0 0.0
    %52 = vmatpush1.msra.mxu0 0.0
    %53 = vmatprep.subr.mxu0 0.0
    %54 = vmatpush1.msra.mxu0 0.0
    %55 = vmatprep.subr.mxu0 0.0
    %56 = vmatpush1.msra.mxu0 0.0
    %57 = vmatprep.subr.mxu0 0.0
    %58 = vmatpush1.msra.mxu0 0.0
    %59 = vmatprep.subr.mxu0 0.0
    %60 = vmatpush1.msra.mxu0 0.0
    %61 = vmatprep.subr.mxu0 0.0
    %62 = vmatpush1.msra.mxu0 0.0
    %63 = vmatprep.subr.mxu0 0.0
    %64 = vmatpush1.msra.mxu0 0.0
    %65 = vmatprep.subr.mxu0 0.0
    %66 = vmatpush1.msra.mxu0 0.0
    %67 = vmatprep.subr.mxu0 0.0
    %68 = vmatpush1.msra.mxu0 0.0
    %69 = vmatprep.subr.mxu0 0.0
    %70 = vmatpush1.msra.mxu0 0.0
    %71 = vmatprep.subr.mxu0 0.0
    %72 = vmatpush1.msra.mxu0 0.0
    %73 = vmatprep.subr.mxu0 0.0
    %74 = vmatpush1.msra.mxu0 0.0
    %75 = vmatprep.subr.mxu0 0.0
    %76 = vmatpush1.msra.mxu0 %v33
    %77 = vmatprep.subr.mxu0 0.0
    %78 = vmatpush1.msra.mxu0 %v32
    %79 = vmatprep.subr.mxu0 0.0
    %80 = vmatpush1.msra.mxu0 %v31
    %81 = vmatprep.subr.mxu0 0.0
    %82 = vmatpush1.msra.mxu0 %v30
    %83 = vmatprep.subr.mxu0 0.0
    %84 = vmatpush2.msra.mxu0 0.0
    %85 = vmatprep.subr.mxu0 0.0
    %86 = vmatpush2.msra.mxu0 0.0
    %87 = vmatprep.subr.mxu0 0.0
    %88 = vmatpush2.msra.mxu0 0.0
    %89 = vmatprep.subr.mxu0 0.0
    %90 = vmatpush2.msra.mxu0 0.0
    %91 = vmatprep.subr.mxu0 0.0
    %92 = vmatpush2.msra.mxu0 0.0
    %93 = vmatprep.subr.mxu0 0.0
    %94 = vmatpush2.msra.mxu0 0.0
    %95 = vmatprep.subr.mxu0 0.0
    %96 = vmatpush2.msra.mxu0 0.0
    %97 = vmatprep.subr.mxu0 0.0
    %98 = vmatpush2.msra.mxu0 0.0
    %99 = vmatprep.subr.mxu0 0.0
    %100 = vmatpush2.msra.mxu0 0.0
    %101 = vmatprep.subr.mxu0 0.0
    %102 = vmatpush2.msra.mxu0 0.0
    %103 = vmatprep.subr.mxu0 0.0
    %104 = vmatpush2.msra.mxu0 0.0
    %105 = vmatprep.subr.mxu0 0.0
    %106 = vmatpush2.msra.mxu0 0.0
    %107 = vmatprep.subr.mxu0 0.0
    %108 = vmatpush2.msra.mxu0 0.0
    %109 = vmatprep.subr.mxu0 0.0
    %110 = vmatpush2.msra.mxu0 0.0
    %111 = vmatprep.subr.mxu0 0.0
    %112 = vmatpush2.msra.mxu0 0.0
    %113 = vmatprep.subr.mxu0 0.0
    %114 = vmatpush2.msra.mxu0 0.0
    %115 = vmatprep.mubr.f32.mxu0 0.0
    %116 = vmatmul.mubr.f32.gmra.mxu0 %v43
    %v117 = vpop.f32.mrf.mxu0
    %v118 = vadd.f32 %v39, %v117
    %v119 = vpop.f32.mrf.mxu0
    %120 = vmatprep.mubr.f32.mxu0 0.0
    %121 = vmatmul.mubr.f32.gmra.mxu0 %v46
    %v122 = vpop.f32.mrf.mxu0
    %v123 = vadd.f32 %v39, %v122
    %v124 = vpop.f32.mrf.mxu0
    %125 = vmatprep.mubr.f32.mxu0 0.0
    %126 = vmatmul.mubr.f32.gmra.mxu0 %v49
    %v127 = vpop.f32.mrf.mxu0
    %v128 = vadd.f32 %v39, %v127
    %v129 = vpop.f32.mrf.mxu0
    %130 = vdwg.mxu0
    %v131 = vmax.f32 %v118, 0.0
    %v132 = vmax.f32 %v123, 0.0
    %v133 = vmax.f32 %v128, 0.0
    %v134 = vld [vmem:[%s3] sm:$0xff]
    %v135 = vld [vmem:[%s3 + $0x8] sm:$0xff]
    %v136 = vld [vmem:[%s3 + $0x10] sm:$0xff]
    %v137 = vld [vmem:[%s3 + $0x18] sm:$0xff]
    %v138 = vld [vmem:[%s3 + $0x20] sm:$0xff]
    %v139 = vld [vmem:[%s3 + $0x28] sm:$0xff]
    %v140 = vld [vmem:[%s3 + $0x30] sm:$0xff]
    %v141 = vld [vmem:[%s3 + $0x38] sm:$0xff]
    %v142 = vld [vmem:[%s3 + $0x40] sm:$0xff]
    %v143 = vld [vmem:[%s3 + $0x48] sm:$0xff]
    %v144 = vld [vmem:[%s3 + $0x50] sm:$0xff]
    %v145 = vld [vmem:[%s3 + $0x58] sm:$0xff]
    %v146 = vld [vmem:[%s3 + $0x60] sm:$0xff]
    %v147 = vld [vmem:[%s3 + $0x68] sm:$0xff]
    %v148 = vld [vmem:[%s3 + $0x70] sm:$0xff]
    %v149 = vld [vmem:[%s3 + $0x78] sm:$0xff]
    %v150 = vld [vmem:[%s4] sm:$0x1]
    %v152 = vlaneseq
    %v153 = vshrl.u32 %v152, 7
    %v154 = vsub.s32 0, %v153
    %v155 = vrot.slane %v150, %v154
    %157 = vmatprep.subr.mxu0 0.0
    %158 = vmatpush1.msra.mxu0 %v149
    %159 = vmatprep.subr.mxu0 0.0
    %160 = vmatpush1.msra.mxu0 %v148
    %161 = vmatprep.subr.mxu0 0.0
    %162 = vmatpush1.msra.mxu0 %v147
    %163 = vmatprep.subr.mxu0 0.0
    %164 = vmatpush1.msra.mxu0 %v146
    %165 = vmatprep.subr.mxu0 0.0
    %166 = vmatpush1.msra.mxu0 %v145
    %167 = vmatprep.subr.mxu0 0.0
    %168 = vmatpush1.msra.mxu0 %v144
    %169 = vmatprep.subr.mxu0 0.0
    %170 = vmatpush1.msra.mxu0 %v143
    %171 = vmatprep.subr.mxu0 0.0
    %172 = vmatpush1.msra.mxu0 %v142
    %173 = vmatprep.subr.mxu0 0.0
    %174 = vmatpush1.msra.mxu0 %v141
    %175 = vmatprep.subr.mxu0 0.0
    %176 = vmatpush1.msra.mxu0 %v140
    %177 = vmatprep.subr.mxu0 0.0
    %178 = vmatpush1.msra.mxu0 %v139
    %179 = vmatprep.subr.mxu0 0.0
    %180 = vmatpush1.msra.mxu0 %v138
    %181 = vmatprep.subr.mxu0 0.0
    %182 = vmatpush1.msra.mxu0 %v137
    %183 = vmatprep.subr.mxu0 0.0
    %184 = vmatpush1.msra.mxu0 %v136
    %185 = vmatprep.subr.mxu0 0.0
    %186 = vmatpush1.msra.mxu0 %v135
    %187 = vmatprep.subr.mxu0 0.0
    %188 = vmatpush1.msra.mxu0 %v134
    %189 = vmatprep.subr.mxu0 0.0
    %190 = vmatpush2.msra.mxu0 0.0
    %191 = vmatprep.subr.mxu0 0.0
    %192 = vmatpush2.msra.mxu0 0.0
    %193 = vmatprep.subr.mxu0 0.0
    %194 = vmatpush2.msra.mxu0 0.0
    %195 = vmatprep.subr.mxu0 0.0
    %196 = vmatpush2.msra.mxu0 0.0
    %197 = vmatprep.subr.mxu0 0.0
    %198 = vmatpush2.msra.mxu0 0.0
    %199 = vmatprep.subr.mxu0 0.0
    %200 = vmatpush2.msra.mxu0 0.0
    %201 = vmatprep.subr.mxu0 0.0
    %202 = vmatpush2.msra.mxu0 0.0
    %203 = vmatprep.subr.mxu0 0.0
    %204 = vmatpush2.msra.mxu0 0.0
    %205 = vmatprep.subr.mxu0 0.0
    %206 = vmatpush2.msra.mxu0 0.0
    %207 = vmatprep.subr.mxu0 0.0
    %208 = vmatpush2.msra.mxu0 0.0
    %209 = vmatprep.subr.mxu0 0.0
    %210 = vmatpush2.msra.mxu0 0.0
    %211 = vmatprep.subr.mxu0 0.0
    %212 = vmatpush2.msra.mxu0 0.0
    %213 = vmatprep.subr.mxu0 0.0
    %214 = vmatpush2.msra.mxu0 0.0
    %215 = vmatprep.subr.mxu0 0.0
    %216 = vmatpush2.msra.mxu0 0.0
    %217 = vmatprep.subr.mxu0 0.0
    %218 = vmatpush2.msra.mxu0 0.0
    %219 = vmatprep.subr.mxu0 0.0
    %220 = vmatpush2.msra.mxu0 0.0
    %221 = vmatprep.mubr.f32.mxu0 0.0
    %222 = vmatmul.mubr.f32.gmra.mxu0 %v131
    %v223 = vpop.f32.mrf.mxu0
    %v224 = vadd.f32 %v155, %v223
    %v225 = vpop.f32.mrf.mxu0
    %226 = vmatprep.mubr.f32.mxu0 0.0
    %227 = vmatmul.mubr.f32.gmra.mxu0 %v132
    %v228 = vpop.f32.mrf.mxu0
    %v229 = vadd.f32 %v155, %v228
    %v230 = vpop.f32.mrf.mxu0
    %231 = vmatprep.mubr.f32.mxu0 0.0
    %232 = vmatmul.mubr.f32.gmra.mxu0 %v133
    %v233 = vpop.f32.mrf.mxu0
    %v234 = vadd.f32 %v155, %v233
    %v235 = vpop.f32.mrf.mxu0
    %236 = vdwg.mxu0
    %v237 = vmax.f32 %v224, 0.0
    %v238 = vmax.f32 %v229, 0.0
    %v239 = vmax.f32 %v234, 0.0
    %v240 = vld [vmem:[%s5] sm:$0xff]
    %v241 = vld [vmem:[%s5 + $0x8] sm:$0xff]
    %v242 = vld [vmem:[%s5 + $0x10] sm:$0xff]
    %v243 = vld [vmem:[%s5 + $0x18] sm:$0xff]
    %v244 = vld [vmem:[%s5 + $0x20] sm:$0xff]
    %v245 = vld [vmem:[%s5 + $0x28] sm:$0xff]
    %v246 = vld [vmem:[%s5 + $0x30] sm:$0xff]
    %v247 = vld [vmem:[%s5 + $0x38] sm:$0xff]
    %v248 = vld [vmem:[%s6] sm:$0x1]
    %v250 = vlaneseq
    %v251 = vshrl.u32 %v250, 7
    %v252 = vsub.s32 0, %v251
    %v253 = vrot.slane %v248, %v252
    %vm255 = vcmask 523264
    %v257 = vsel %vm255, %v237, 0
    %v260 = vsel %vm255, %v238, 0
    %v263 = vsel %vm255, %v239, 0
    %265 = vmatprep.subr.mxu0 0.0
    %266 = vmatpush1.msra.mxu0 0.0
    %267 = vmatprep.subr.mxu0 0.0
    %268 = vmatpush1.msra.mxu0 0.0
    %269 = vmatprep.subr.mxu0 0.0
    %270 = vmatpush1.msra.mxu0 0.0
    %271 = vmatprep.subr.mxu0 0.0
    %272 = vmatpush1.msra.mxu0 0.0
    %273 = vmatprep.subr.mxu0 0.0
    %274 = vmatpush1.msra.mxu0 0.0
    %275 = vmatprep.subr.mxu0 0.0
    %276 = vmatpush1.msra.mxu0 0.0
    %277 = vmatprep.subr.mxu0 0.0
    %278 = vmatpush1.msra.mxu0 0.0
    %279 = vmatprep.subr.mxu0 0.0
    %280 = vmatpush1.msra.mxu0 0.0
    %281 = vmatprep.subr.mxu0 0.0
    %282 = vmatpush1.msra.mxu0 %v247
    %283 = vmatprep.subr.mxu0 0.0
    %284 = vmatpush1.msra.mxu0 %v246
    %285 = vmatprep.subr.mxu0 0.0
    %286 = vmatpush1.msra.mxu0 %v245
    %287 = vmatprep.subr.mxu0 0.0
    %288 = vmatpush1.msra.mxu0 %v244
    %289 = vmatprep.subr.mxu0 0.0
    %290 = vmatpush1.msra.mxu0 %v243
    %291 = vmatprep.subr.mxu0 0.0
    %292 = vmatpush1.msra.mxu0 %v242
    %293 = vmatprep.subr.mxu0 0.0
    %294 = vmatpush1.msra.mxu0 %v241
    %295 = vmatprep.subr.mxu0 0.0
    %296 = vmatpush1.msra.mxu0 %v240
    %297 = vmatprep.subr.mxu0 0.0
    %298 = vmatpush2.msra.mxu0 0.0
    %299 = vmatprep.subr.mxu0 0.0
    %300 = vmatpush2.msra.mxu0 0.0
    %301 = vmatprep.subr.mxu0 0.0
    %302 = vmatpush2.msra.mxu0 0.0
    %303 = vmatprep.subr.mxu0 0.0
    %304 = vmatpush2.msra.mxu0 0.0
    %305 = vmatprep.subr.mxu0 0.0
    %306 = vmatpush2.msra.mxu0 0.0
    %307 = vmatprep.subr.mxu0 0.0
    %308 = vmatpush2.msra.mxu0 0.0
    %309 = vmatprep.subr.mxu0 0.0
    %310 = vmatpush2.msra.mxu0 0.0
    %311 = vmatprep.subr.mxu0 0.0
    %312 = vmatpush2.msra.mxu0 0.0
    %313 = vmatprep.subr.mxu0 0.0
    %314 = vmatpush2.msra.mxu0 0.0
    %315 = vmatprep.subr.mxu0 0.0
    %316 = vmatpush2.msra.mxu0 0.0
    %317 = vmatprep.subr.mxu0 0.0
    %318 = vmatpush2.msra.mxu0 0.0
    %319 = vmatprep.subr.mxu0 0.0
    %320 = vmatpush2.msra.mxu0 0.0
    %321 = vmatprep.subr.mxu0 0.0
    %322 = vmatpush2.msra.mxu0 0.0
    %323 = vmatprep.subr.mxu0 0.0
    %324 = vmatpush2.msra.mxu0 0.0
    %325 = vmatprep.subr.mxu0 0.0
    %326 = vmatpush2.msra.mxu0 0.0
    %327 = vmatprep.subr.mxu0 0.0
    %328 = vmatpush2.msra.mxu0 0.0
    %329 = vmatprep.mubr.f32.mxu0 0.0
    %330 = vmatmul.mubr.f32.gmra.mxu0 %v257
    %v331 = vpop.f32.mrf.mxu0
    %v332 = vadd.f32 %v253, %v331
    %v333 = vpop.f32.mrf.mxu0
    %334 = vmatprep.mubr.f32.mxu0 0.0
    %335 = vmatmul.mubr.f32.gmra.mxu0 %v260
    %v336 = vpop.f32.mrf.mxu0
    %v337 = vadd.f32 %v253, %v336
    %v338 = vpop.f32.mrf.mxu0
    %339 = vmatprep.mubr.f32.mxu0 0.0
    %340 = vmatmul.mubr.f32.gmra.mxu0 %v263
    %v341 = vpop.f32.mrf.mxu0
    %v342 = vadd.f32 %v253, %v341
    %v343 = vpop.f32.mrf.mxu0
    %344 = vdwg.mxu0
    %345 = vst [vmem:[#allocation2] sm:$0xff] %v332
    %346 = vst [vmem:[#allocation2 + $0x8] sm:$0xff] %v337
    %347 = vst [vmem:[#allocation2 + $0x10] sm:$0xff] %v342
    // Predicated region
    $region30: #{tpu_custom_call.1} parent=1 // pred_check
      _
    $region31: #{tpu_custom_call.1} parent=1 // pred_check_branch
      %349 = sbr.rel (0) target = $region33
    $region32: #{tpu_custom_call.1} parent=1 // pred_region
      %s351 = ssub.s32 384, 384
      %352 = vsyncadd [#allocation3], %s351
      %s353 = sshll.u32 [#allocation2], 4
      %s354 = int_to_ptr.vmem [resolvable:$true] %s353
      %359 = dma.vmem_to_hbm [thread:$0]  %s354, 384, %s7, [#allocation3], 128, 128, 8
    $region33: #{tpu_custom_call.1} parent=1 // pred_fallthru
      _
    // Predicated region
    $region34: #{tpu_custom_call.1} parent=1 // pred_check
      _
    $region35: #{tpu_custom_call.1} parent=1 // pred_check_branch
      %361 = sbr.rel (0) target = $region37
    $region36: #{tpu_custom_call.1} parent=1 // pred_region
      %362 = dma.done [#allocation3], 384
    $region37: #{tpu_custom_call.1} parent=1 // pred_fallthru
      _
    %363 = vsyncpa [#allocation3], 1

</llo_original>
